<compile_context>
chip_gen: v7x
topology: tpu7x:2x2x1
jax: 0.10.0
libtpu: 0.0.40
codegen_flags: <defaults>
</compile_context>

<pallas_src>
import functools

import jax
import jax.numpy as jnp
import numpy as np
from jax import lax
from jax.experimental import pallas as pl
from jax.experimental.pallas import tpu as pltpu

KH, KW, KD = 7, 7, 3            # Conv3d kernel size over (H, W, depth)
PH, PW, PD = 3, 3, 1            # Conv3d padding     over (H, W, depth)
CMID = 4                        # hidden channels (conv1 out / conv2 in)
KVOL = KH * KW * KD             # taps per (in,out) channel pair = 147


def _round_up(x, m):
    return ((x + m - 1) // m) * m


@functools.lru_cache(maxsize=None)
def _roll_is_numpy_convention():
    """True iff pltpu.roll(x, s, axis)[j] == x[(j - s) % n] (np.roll convention)."""
    def probe(x_ref, o_ref):
        o_ref[...] = pltpu.roll(x_ref[...], 1, axis=1)
    x = jnp.tile(jnp.arange(128, dtype=jnp.float32)[None, :], (8, 1))
    y = pl.pallas_call(probe,
                       out_shape=jax.ShapeDtypeStruct((8, 128), jnp.float32))(x)
    return bool(np.asarray(jax.device_get(y))[0, 1] == 0.0)


def _vmem_capacity_bytes():
    try:
        info = pltpu.get_tpu_info()
        cap = getattr(info, "vmem_capacity_bytes", None)
        if cap:
            return int(cap)
    except Exception:
        pass
    return 64 * 1024 * 1024   # conservative default (v7x-sized)


def _tile_vmem_bytes(TH, Wt, D):
    xwin = 2 * (D + 2) * (TH + 4 * PH) * Wt        # double-buffered input window
    hid = CMID * (D + 2) * (TH + 2 * PH) * Wt      # hidden activations + halos
    outb = 2 * D * TH * Wt                         # double-buffered output block
    return 4 * (xwin + hid + outb)


def _pick_tile_h(H, Wt, D, budget):
    h8 = _round_up(H, 8)
    best = 8
    for th in range(8, min(h8, 512) + 1, 8):
        if _tile_vmem_bytes(th, Wt, D) <= budget:
            best = th
    return min(best, h8)


def _fused_residual_kernel(TH, W, Wt, H, D, do_prefetch, roll_fwd,
                           xpad_ref, w1_ref, b1_ref, w2_ref, b2_ref,
                           out_ref, xwin_ref, hid_ref, dma_sem):
    """One grid step = one (batch element, H tile of TH output rows).

    xpad_ref : ANY/HBM (N, D+2, T*TH+12, Wt) zero-padded input
    w1/b1/w2/b2 : SMEM flat conv weights / biases
    out_ref  : VMEM (1, D, TH, Wt)
    xwin_ref : VMEM (2, D+2, TH+12, Wt)   double-buffered input window
    hid_ref  : VMEM (CMID, D+2, TH+6, Wt) hidden activations (+ zero halos)
    """
    n = pl.program_id(0)
    t = pl.program_id(1)
    num_t = pl.num_programs(1)

    HH = TH + 2 * PH        # hidden rows computed per tile (incl. conv2 H halo)
    XR = TH + 4 * PH        # input rows per tile window
    NB1 = TH // 8 + 1       # 8-row hidden blocks (last overlaps previous by 2)
    NB2 = TH // 8           # 8-row output blocks

    def lane_shift(v, kw):
        # Cyclic shift so column j picks up column (j + kw - PW); the wrap lands
        # in the zero-padded lanes [W, Wt) => exact PyTorch zero padding.
        s = (PW - kw) % Wt if roll_fwd else (kw - PW) % Wt
        return v if s == 0 else pltpu.roll(v, s, axis=1)

    slot = t % 2

    def start_fetch(tile_idx, slot_idx):
        row0 = pl.multiple_of(tile_idx * TH, 8)
        pltpu.make_async_copy(
            xpad_ref.at[n, :, pl.ds(row0, XR), :],
            xwin_ref.at[slot_idx],
            dma_sem.at[slot_idx],
        ).start()

    if do_prefetch:
        @pl.when(t == 0)
        def _():
            start_fetch(t, slot)
    else:
        start_fetch(t, slot)

    # Wait for this tile's window (started above, or prefetched by tile t-1).
    pltpu.make_async_copy(
        xpad_ref.at[n, :, pl.ds(pl.multiple_of(t * TH, 8), XR), :],
        xwin_ref.at[slot],
        dma_sem.at[slot],
    ).wait()

    if do_prefetch:
        @pl.when(t + 1 < num_t)
        def _():
            start_fetch(t + 1, 1 - slot)

    # Hoisted constants (never rebuilt inside the tap loops).
    col_mask = lax.broadcasted_iota(jnp.int32, (8, Wt), 1) < W
    row_ids = lax.broadcasted_iota(jnp.int32, (8, Wt), 0)
    b1_vecs = [jnp.zeros((8, Wt), jnp.float32) + b1_ref[c] for c in range(CMID)]
    b2_vec = jnp.zeros((8, Wt), jnp.float32) + b2_ref[0]

    # ---- conv1 (1 -> 4) + ReLU; result lives only in the hid VMEM scratch. ----
    def conv1_d(d, carry):
        def conv1_h(b, carry2):
            r0 = jnp.minimum(b * 8, HH - 8)           # last block overlaps by 2 rows
            accs = list(b1_vecs)                      # 4 x (8, Wt) vreg accumulators
            for kd in range(KD):
                for kh in range(KH):
                    slab = xwin_ref[slot, d + kd, pl.ds(r0 + kh, 8), :]
                    base = kh * KW * KD + kd
                    for kw in range(KW):
                        sh = lane_shift(slab, kw)
                        widx = base + kw * KD
                        for c in range(CMID):
                            accs[c] = accs[c] + w1_ref[c * KVOL + widx] * sh
            # Hidden rows/cols outside the image are conv2 *padding*: force zero
            # (not conv1-of-zero-input, which would carry the conv1 bias).
            rows = row_ids + (t * TH + r0 - PH)
            mask = jnp.logical_and(jnp.logical_and(rows >= 0, rows < H), col_mask)
            for c in range(CMID):
                hid_ref[c, d + 1, pl.ds(r0, 8), :] = jnp.where(
                    mask, jnp.maximum(accs[c], 0.0), 0.0)
            return carry2
        return lax.fori_loop(0, NB1, conv1_h, carry)

    lax.fori_loop(0, D, conv1_d, 0)

    # Depth padding planes read by conv2 (never written by conv1).
    zplane = jnp.zeros((HH, Wt), jnp.float32)
    for c in range(CMID):
        hid_ref[c, 0, :, :] = zplane
        hid_ref[c, D + 1, :, :] = zplane

    # ---- conv2 (4 -> 1) + bias + residual add -> lane-dense output block. ----
    def conv2_d(d, carry):
        def conv2_h(b, carry2):
            r0 = pl.multiple_of(b * 8, 8)
            acc = xwin_ref[slot, d + 1, pl.ds(2 * PH + r0, 8), :] + b2_vec
            for kd in range(KD):
                for kh in range(KH):
                    slabs = [hid_ref[c, d + kd, pl.ds(r0 + kh, 8), :]
                             for c in range(CMID)]
                    base = kh * KW * KD + kd
                    for kw in range(KW):
                        widx = base + kw * KD
                        p = sum(w2_ref[c * KVOL + widx] * slabs[c]
                                for c in range(CMID))
                        acc = acc + lane_shift(p, kw)
            out_ref[0, d, pl.ds(r0, 8), :] = acc
            return carry2
        return lax.fori_loop(0, NB2, conv2_h, carry)

    lax.fori_loop(0, D, conv2_d, 0)


def residual_block_forward(x, w1, b1, w2, b2, *, tile_h=None):
    """x: [N, n_depths, H, W] -> [N, n_depths, H, W], matching ResidualBlock.forward."""
    N, D, H, W = x.shape
    x = x.astype(jnp.float32)

    Wt = _round_up(W + PW, 128)                 # lane-dense scratch/output width
    cap = _vmem_capacity_bytes()
    budget = max(12 << 20, int(cap * 0.33))     # per-tile working-set budget

    TH = _pick_tile_h(H, Wt, D, budget) if tile_h is None else int(tile_h)
    TH = max(8, _round_up(TH, 8))
    TH = min(TH, _round_up(H, 8))
    T = -(-H // TH)                             # cdiv: ragged last tile allowed
    Hp = T * TH

    # Pad once in HBM: depth by 1 plane each side, H so every tile window is a
    # plain in-bounds block, W up to the lane-aligned Wt (all zeros).
    xpad = jnp.pad(x, ((0, 0), (PD, PD), (2 * PH, Hp - H + 2 * PH), (0, Wt - W)))

    w1f = w1[:, 0].reshape(-1).astype(jnp.float32)    # (c_out, kh, kw, kd) flat
    w2f = w2[0].reshape(-1).astype(jnp.float32)       # (c_in,  kh, kw, kd) flat
    b1f = b1.astype(jnp.float32).reshape((CMID,))
    b2f = b2.astype(jnp.float32).reshape((1,))

    # Batch axis parallel + sequential H tiles (enables prefetch of tile t+1).
    # With a single batch element and several tiles, parallelize tiles instead
    # so both TensorCores get work on v7x (no cross-step prefetch in that case).
    if N == 1 and T > 1:
        do_prefetch = False
        dims = ("parallel", "parallel")
    else:
        do_prefetch = True
        dims = ("parallel", "arbitrary")

    need = _tile_vmem_bytes(TH, Wt, D)
    vmem_limit = int(min(cap * 0.85, max(32 << 20, 2 * need)))
    vmem_limit = max(vmem_limit, need + (2 << 20))

    smem_spec = pl.BlockSpec(memory_space=pltpu.MemorySpace.SMEM)
    any_spec = pl.BlockSpec(memory_space=pl.ANY)

    kernel = functools.partial(
        _fused_residual_kernel, TH, W, Wt, H, D, do_prefetch,
        _roll_is_numpy_convention())

    out = pl.pallas_call(
        kernel,
        out_shape=jax.ShapeDtypeStruct((N, D, Hp, Wt), jnp.float32),
        grid_spec=pltpu.PrefetchScalarGridSpec(
            num_scalar_prefetch=0,
            grid=(N, T),
            in_specs=[
                any_spec,      # padded input stays in HBM; windows fetched by DMA
                smem_spec,     # w1 flat
                smem_spec,     # b1
                smem_spec,     # w2 flat
                smem_spec,     # b2
            ],
            out_specs=pl.BlockSpec((1, D, TH, Wt), lambda n, t: (n, 0, t, 0)),
            scratch_shapes=[
                pltpu.VMEM((2, D + 2, TH + 4 * PH, Wt), jnp.float32),      # xwin
                pltpu.VMEM((CMID, D + 2, TH + 2 * PH, Wt), jnp.float32),   # hid
                pltpu.SemaphoreType.DMA((2,)),
            ],
        ),
        compiler_params=pltpu.CompilerParams(
            dimension_semantics=dims,
            vmem_limit_bytes=vmem_limit,
        ),
    )(xpad, w1f, b1f, w2f, b2f)

    return out[:, :, :H, :W]


def residual_block_reference(x, w1, b1, w2, b2):
    """Pure-JAX reference using lax.conv_general_dilated (mirrors the PyTorch graph)."""
    x = x.astype(jnp.float32)
    xp = jnp.transpose(x, (0, 2, 3, 1))[:, None]           # [N, 1, H, W, D]
    dn = ("NCDHW", "OIDHW", "NCDHW")
    y1 = lax.conv_general_dilated(
        xp, w1, window_strides=(1, 1, 1),
        padding=((PH, PH), (PW, PW), (PD, PD)), dimension_numbers=dn)
    y1 = jnp.maximum(y1 + b1[None, :, None, None, None], 0.0)
    y2 = lax.conv_general_dilated(
        y1, w2, window_strides=(1, 1, 1),
        padding=((PH, PH), (PW, PW), (PD, PD)), dimension_numbers=dn)
    y2 = y2 + b2[None, :, None, None, None]
    out = xp + y2
    return jnp.transpose(out[:, 0], (0, 3, 1, 2))


if __name__ == "__main__":
    key = jax.random.PRNGKey(0)

    def make_params(k):
        k1, k2, k3, k4 = jax.random.split(k, 4)
        w1 = 0.1 * jax.random.normal(k1, (CMID, 1, KH, KW, KD), dtype=jnp.float32)
        b1 = 0.1 * jax.random.normal(k2, (CMID,), dtype=jnp.float32)
        w2 = 0.1 * jax.random.normal(k3, (1, CMID, KH, KW, KD), dtype=jnp.float32)
        b2 = 0.1 * jax.random.normal(k4, (1,), dtype=jnp.float32)
        return w1, b1, w2, b2

    # Case 1: batch=2, n_depths=4, 16x16 frames, tile_h=8 -> 2 H-tiles per image
    # (exercises the prefetch double-buffer + hidden-halo recompute path).
    kx, kp, key = jax.random.split(key, 3)
    x = jax.random.normal(kx, (2, 4, 16, 16), dtype=jnp.float32)
    w1, b1, w2, b2 = make_params(kp)
    out = jax.block_until_ready(residual_block_forward(x, w1, b1, w2, b2, tile_h=8))
    assert out.shape == x.shape
    ref = residual_block_reference(x, w1, b1, w2, b2)
    np.testing.assert_allclose(np.asarray(out), np.asarray(ref), rtol=2e-4, atol=2e-4)

    # Case 2: odd depth count and non-power-of-two W, default (single-tile) path.
    kx2, kp2, key = jax.random.split(key, 3)
    x2 = jax.random.normal(kx2, (1, 3, 24, 20), dtype=jnp.float32)
    w1b, b1b, w2b, b2b = make_params(kp2)
    out2 = jax.block_until_ready(residual_block_forward(x2, w1b, b1b, w2b, b2b))
    ref2 = residual_block_reference(x2, w1b, b1b, w2b, b2b)
    np.testing.assert_allclose(np.asarray(out2), np.asarray(ref2), rtol=2e-4, atol=2e-4)

    # Case 3: ragged H tiling (H=33, tile_h=16 -> tiles of 16/16/1 valid rows),
    # single batch element -> tile axis becomes the parallel axis.
    kx3, kp3, key = jax.random.split(key, 3)
    x3 = jax.random.normal(kx3, (1, 3, 33, 20), dtype=jnp.float32)
    w1c, b1c, w2c, b2c = make_params(kp3)
    out3 = jax.block_until_ready(
        residual_block_forward(x3, w1c, b1c, w2c, b2c, tile_h=16))
    ref3 = residual_block_reference(x3, w1c, b1c, w2c, b2c)
    np.testing.assert_allclose(np.asarray(out3), np.asarray(ref3), rtol=2e-4, atol=2e-4)

    print("KERNEL_OK")
</pallas_src>

<mosaic_0001>
module attributes {stable_mosaic.version = 11 : i64} {
  func.func @probe(%arg0: memref<8x128xf32, #tpu.memory_space<vmem>>, %arg1: memref<8x128xf32, #tpu.memory_space<vmem>>) attributes {dimension_semantics = [], scalar_prefetch = 0 : i64, scratch_operands = 0 : i64, tpu.core_type = #tpu.core_type<tc>} {
    %c0 = arith.constant 0 : index
    %c0_0 = arith.constant 0 : index
    %0 = vector.load %arg0[%c0, %c0_0] : memref<8x128xf32, #tpu.memory_space<vmem>>, vector<8x128xf32>
    %c1_i32 = arith.constant 1 : i32
    %1 = tpu.dynamic_rotate %0 by %c1_i32 dim 1 : vector<8x128xf32>, i32 -> vector<8x128xf32>
    %c0_1 = arith.constant 0 : index
    %c0_2 = arith.constant 0 : index
    %2 = vector.load %arg1[%c0_1, %c0_2] : memref<8x128xf32, #tpu.memory_space<vmem>>, vector<8x128xf32>
    tpu.vector_store %arg1[%c0_1, %c0_2], %1 {strides = array<i32>} : memref<8x128xf32, #tpu.memory_space<vmem>>, vector<8x128xf32>,
    return
  }
}

</mosaic_0001>

<llo_original>
// kernel: tpu_custom_call.1
$region0: #{tpu_custom_call.1}
  #allocation0 [shape = 'u32[]', space=smem, size = 0x4, offset = 0x4, fixed_abs, tag = 'smem constant byte address 0x4 - core index']
  #allocation1 [shape = 'u32[144,128]{1,0:T(1,128)}', space=vmem, size = 0x12000, scoped, tag = 'internal scratch']
  %s0 = inlined_call_operand.hbm [shape: f32[8,128], index: 0, kind: input, shape index: {}]
  %s1 = inlined_call_operand.hbm [shape: f32[8,128], index: 1, kind: output, shape index: {}]
  %s2 = sld [smem:[#allocation0]]
  $region18: #{tpu_custom_call.1} parent=0
    _
  %s4 = ssub.s32 1, %s2
  %s5 = scalar_select 0, %s4, %s2
  $region1: #{tpu_custom_call.1} parent=0
    #allocation2 [shape = 'u8[4096]{0}', space=vmem, size = 0x1000, scoped, tag = 'input window, operand 0, single buffered']
    #allocation3 [shape = 's32[1]{0}', space=sflag, size = 0x4, scoped, tag = 'scoped memory for tpu_custom_call.1']
    #allocation4 [shape = 's32[1]{0}', space=sflag, size = 0x4, scoped, tag = 'scoped memory for tpu_custom_call.1']
    #allocation5 [shape = 'u8[4096]{0}', space=vmem, size = 0x1000, scoped, tag = 'output window, operand 0, single buffered']
    %6 = vsyncpa [#allocation3], 0
    %7 = vsyncpa [#allocation4], 0
    // Predicated region
    $region2: #{tpu_custom_call.1} parent=1 // pred_check
      _
    $region3: #{tpu_custom_call.1} parent=1 // pred_check_branch
      %9 = sbr.rel (0) target = $region5
    $region4: #{tpu_custom_call.1} parent=1 // pred_region
      %s11 = ssub.s32 128, 128
      %12 = vsyncadd [#allocation3], %s11
      %s14 = sshll.u32 [#allocation2], 4
      %s15 = int_to_ptr.vmem [resolvable:$true] %s14
      %17 = dma.hbm_to_vmem [thread:$0]  %s0, 128, %s15, [#allocation3]
    $region5: #{tpu_custom_call.1} parent=1 // pred_fallthru
      _
    // Predicated region
    $region6: #{tpu_custom_call.1} parent=1 // pred_check
      _
    $region7: #{tpu_custom_call.1} parent=1 // pred_check_branch
      %19 = sbr.rel (0) target = $region9
    $region8: #{tpu_custom_call.1} parent=1 // pred_region
      %20 = dma.done [#allocation3], 128
    $region9: #{tpu_custom_call.1} parent=1 // pred_fallthru
      _
    %v21 = vld [vmem:[#allocation2] sm:$0xff]
    %22 = vrot.lane.b32.xlu0 %v21, 1
    %v23 = vpop.permute.xlu0 %22
    %24 = vst [vmem:[#allocation5] sm:$0xff] %v23
    // Predicated region
    $region10: #{tpu_custom_call.1} parent=1 // pred_check
      _
    $region11: #{tpu_custom_call.1} parent=1 // pred_check_branch
      %26 = sbr.rel (0) target = $region13
    $region12: #{tpu_custom_call.1} parent=1 // pred_region
      %s28 = ssub.s32 128, 128
      %29 = vsyncadd [#allocation4], %s28
      %s31 = sshll.u32 [#allocation5], 4
      %s32 = int_to_ptr.vmem [resolvable:$true] %s31
      %34 = dma.vmem_to_hbm [thread:$0]  %s32, 128, %s1, [#allocation4]
    $region13: #{tpu_custom_call.1} parent=1 // pred_fallthru
      _
    // Predicated region
    $region14: #{tpu_custom_call.1} parent=1 // pred_check
      _
    $region15: #{tpu_custom_call.1} parent=1 // pred_check_branch
      %36 = sbr.rel (0) target = $region17
    $region16: #{tpu_custom_call.1} parent=1 // pred_region
      %37 = dma.done [#allocation4], 128
    $region17: #{tpu_custom_call.1} parent=1 // pred_fallthru
      _
    %38 = vsyncpa [#allocation3], 1
    %39 = vsyncpa [#allocation4], 1

</llo_original>
